<compile_context>
chip_gen: v7x
topology: tpu7x:2x2x1
jax: 0.10.0
libtpu: 0.0.40
codegen_flags: <defaults>
</compile_context>

<pallas_src>
from functools import partial

import jax
import jax.numpy as jnp
from jax.experimental import pallas as pl
from jax.experimental.pallas import tpu as pltpu


def _round_up(v, m):
    return ((v + m - 1) // m) * m


def _cdiv(a, b):
    return (a + b - 1) // b


def _output_block_kernel(num_layers, bs_ref, nb_ref, idx_ref, h_ref, *rest):
    """Grid = (node tiles, edge blocks).  bs/nb are SMEM scalar-prefetch refs."""
    layer_refs = rest[: 2 * num_layers]
    w_out_ref = rest[2 * num_layers]
    out_ref = rest[2 * num_layers + 1]
    acc_ref = rest[2 * num_layers + 2]

    n = pl.program_id(0)
    e = pl.program_id(1)
    tn = acc_ref.shape[0]

    @pl.when(e == 0)
    def _():
        acc_ref[...] = jnp.zeros_like(acc_ref)

    # ---- scatter-sum this (sorted) edge block into the node-tile accumulator ----
    @pl.when(e < nb_ref[n])
    def _():
        rel = idx_ref[...] - n * tn                              # (1, TE) int32
        row = jax.lax.broadcasted_iota(jnp.int32, (tn, 1), 0)    # (TN, 1)
        onehot = (rel == row).astype(jnp.bfloat16)               # (TN, TE), exact 0/1
        acc_ref[...] += jnp.dot(onehot, h_ref[...],
                                preferred_element_type=jnp.float32)

    # ---- after the last edge block: hidden MLP (SiLU) + final projection ----
    @pl.when(e == pl.num_programs(1) - 1)
    def _():
        xn = acc_ref[...]
        for l in range(num_layers):
            w = layer_refs[2 * l][...]           # bf16 (Hp, Hp), VMEM-resident
            b = layer_refs[2 * l + 1][...]       # f32  (1, Hp)
            z = jnp.dot(xn.astype(jnp.bfloat16), w,
                        preferred_element_type=jnp.float32) + b
            xn = z * jax.nn.sigmoid(z)           # SiLU / swish (exp -> EUP slot)
        out_ref[...] = jnp.dot(xn.astype(jnp.bfloat16), w_out_ref[...],
                               preferred_element_type=jnp.float32
                               ).astype(out_ref.dtype)


def output_block(x, rbf, i, params, num_nodes, *, edge_tile=1024, node_tile=256):
    """x: [E, H] edge features, rbf: [E, R], i: [E] int32 edge->node index."""
    num_layers = len(params["lins"])
    E, H = x.shape
    O = params["w_out"].shape[1]
    f32, bf16 = jnp.float32, jnp.bfloat16

    Hp = _round_up(H, 128)

    # Node tiling: keep >=2 tiles when the graph is small (v7x megacore).
    TN = max(8, min(node_tile, _round_up(_cdiv(num_nodes, 2), 8)))
    NB_n = _cdiv(num_nodes, TN)
    Np = NB_n * TN

    # Edge tiling (large tiles -> fewer grid steps, longer DMA bursts).
    TE = min(edge_tile, _round_up(E, 128))
    Ep = _round_up(E, TE)
    NB_e = Ep // TE

    # ---- hoisted edge projection: h = (rbf @ W_rbf) * x  (bf16 MXU, f32 acc) ----
    proj = jnp.dot(rbf.astype(bf16), params["w_rbf"].astype(bf16),
                   preferred_element_type=f32)
    h = (proj * x).astype(bf16)                                    # (E, H)

    # ---- sort edges by destination node (segment scatter) ----
    order = jnp.argsort(i)
    i_s = i[order].astype(jnp.int32)
    h_s = h[order]

    h_p = jnp.zeros((Ep, Hp), bf16).at[:E, :H].set(h_s)
    idx_p = jnp.full((1, Ep), Np, jnp.int32).at[0, :E].set(i_s)    # pad -> no node

    # Per-node-tile edge-block ranges, scalar-prefetched into SMEM.
    bounds = jnp.arange(NB_n + 1, dtype=jnp.int32) * TN
    pos = jnp.searchsorted(i_s, bounds, side="left").astype(jnp.int32)
    starts, ends = pos[:-1], pos[1:]
    raw_start = starts // TE
    blk_start = jnp.minimum(raw_start, NB_e - 1).astype(jnp.int32)
    nblk = jnp.where(ends > starts,
                     (ends - 1) // TE - raw_start + 1, 0).astype(jnp.int32)

    # ---- specs: edge data streamed via prefetched offsets, weights resident ----
    def idx_map(n, e, bs, nb):
        last = bs[n] + jnp.maximum(nb[n], 1) - 1
        return (0, jnp.minimum(bs[n] + e, last))

    def h_map(n, e, bs, nb):
        last = bs[n] + jnp.maximum(nb[n], 1) - 1
        return (jnp.minimum(bs[n] + e, last), 0)

    def const_map(n, e, bs, nb):
        return (0, 0)

    inputs = [idx_p, h_p]
    in_specs = [pl.BlockSpec((1, TE), idx_map),
                pl.BlockSpec((TE, Hp), h_map)]
    for (w, b) in params["lins"]:
        w_p = jnp.zeros((Hp, Hp), bf16).at[:H, :H].set(w.astype(bf16))
        b_p = jnp.zeros((1, Hp), f32).at[0, :H].set(b.astype(f32))
        inputs += [w_p, b_p]
        in_specs += [pl.BlockSpec((Hp, Hp), const_map),
                     pl.BlockSpec((1, Hp), const_map)]
    w_out_p = jnp.zeros((Hp, O), bf16).at[:H, :O].set(params["w_out"].astype(bf16))
    inputs.append(w_out_p)
    in_specs.append(pl.BlockSpec((Hp, O), const_map))

    # Edge blocks are visited ~once each (plus one boundary/idle block per tile).
    flops = (2 * (E + NB_n * TE) * TN * Hp
             + num_layers * 2 * Np * Hp * Hp
             + 2 * Np * Hp * O)
    bytes_accessed = (2 * (E + NB_n * TE) * Hp          # bf16 h stream
                      + 4 * (E + NB_n * TE)             # int32 edge indices
                      + num_layers * (2 * Hp * Hp + 4 * Hp)
                      + 2 * Hp * O
                      + 4 * Np * O)

    out_padded = pl.pallas_call(
        partial(_output_block_kernel, num_layers),
        out_shape=jax.ShapeDtypeStruct((Np, O), f32),
        grid_spec=pltpu.PrefetchScalarGridSpec(
            num_scalar_prefetch=2,
            grid=(NB_n, NB_e),
            in_specs=in_specs,
            out_specs=pl.BlockSpec((TN, O), lambda n, e, bs, nb: (n, 0)),
            scratch_shapes=[pltpu.VMEM((TN, Hp), f32)]),
        compiler_params=pltpu.CompilerParams(
            dimension_semantics=("parallel", "arbitrary")),
        cost_estimate=pl.CostEstimate(
            flops=int(flops),
            transcendentals=int(num_layers * Np * Hp),
            bytes_accessed=int(bytes_accessed)),
    )(blk_start, nblk, *inputs)

    # Padded node rows carry silu(bias) garbage by construction -> slice them off.
    return out_padded[:num_nodes, :O]


def output_block_reference(x, rbf, i, params, num_nodes):
    """Pure-JAX f32 reference mirroring the PyTorch forward."""
    h = (rbf @ params["w_rbf"]) * x
    xn = jax.ops.segment_sum(h, i, num_segments=num_nodes)
    for (w, b) in params["lins"]:
        xn = jax.nn.silu(xn @ w + b)
    return xn @ params["w_out"]


def init_params(key, num_radial, hidden_channels, out_channels, num_layers):
    ks = jax.random.split(key, 2 + 2 * num_layers)
    params = {
        "w_rbf": jax.random.normal(ks[0], (num_radial, hidden_channels),
                                   jnp.float32) * 0.1,
        "lins": [],
        "w_out": jax.random.normal(ks[1], (hidden_channels, out_channels),
                                   jnp.float32) * 0.1,
    }
    for l in range(num_layers):
        w = jax.random.normal(ks[2 + 2 * l],
                              (hidden_channels, hidden_channels),
                              jnp.float32) * 0.1
        b = jax.random.normal(ks[3 + 2 * l], (hidden_channels,),
                              jnp.float32) * 0.1
        params["lins"].append((w, b))
    return params


if __name__ == "__main__":
    num_radial = 16
    hidden_channels = 32
    out_channels = 16
    num_layers = 2
    num_edges = 200          # deliberately not a tile multiple (exercises padding)
    num_nodes = 50

    key = jax.random.PRNGKey(0)
    k_x, k_rbf, k_i, k_p = jax.random.split(key, 4)

    x = jax.random.normal(k_x, (num_edges, hidden_channels), jnp.float32)
    rbf = jax.random.normal(k_rbf, (num_edges, num_radial), jnp.float32)
    i = jax.random.randint(k_i, (num_edges,), 0, num_nodes, jnp.int32)
    params = init_params(k_p, num_radial, hidden_channels, out_channels,
                         num_layers)

    out = output_block(x, rbf, i, params, num_nodes)
    out = jax.block_until_ready(out)

    ref = output_block_reference(x, rbf, i, params, num_nodes)
    assert out.shape == (num_nodes, out_channels)
    # bf16 operands (f32 accumulation) in projection / scatter / MLP matmuls.
    assert jnp.allclose(out, ref, atol=3e-2, rtol=3e-2), (
        float(jnp.max(jnp.abs(out - ref))))

    print("KERNEL_OK")
</pallas_src>

<mosaic_0001>
module attributes {stable_mosaic.version = 11 : i64} {
  func.func @_output_block_kernel(%arg0: i32, %arg1: i32, %arg2: memref<2xi32, #tpu.memory_space<smem>>, %arg3: memref<2xi32, #tpu.memory_space<smem>>, %arg4: memref<1x256xi32, #tpu.memory_space<vmem>>, %arg5: memref<256x128xbf16, #tpu.memory_space<vmem>>, %arg6: memref<128x128xbf16, #tpu.memory_space<vmem>>, %arg7: memref<1x128xf32, #tpu.memory_space<vmem>>, %arg8: memref<128x128xbf16, #tpu.memory_space<vmem>>, %arg9: memref<1x128xf32, #tpu.memory_space<vmem>>, %arg10: memref<128x16xbf16, #tpu.memory_space<vmem>>, %arg11: memref<32x16xf32, #tpu.memory_space<vmem>>, %arg12: memref<32x128xf32, #tpu.memory_space<vmem>>) attributes {dimension_semantics = [#tpu.dimension_semantics<parallel>, #tpu.dimension_semantics<arbitrary>], iteration_bounds = array<i64: 2, 1>, scalar_prefetch = 2 : i64, scratch_operands = 1 : i64, tpu.core_type = #tpu.core_type<tc>, window_params = [{transform_indices = @transform_0, window_bounds = array<i64: 1, 256>}, {transform_indices = @transform_1, window_bounds = array<i64: 256, 128>}, {pipeline_mode = #tpu.pipeline_mode<synchronous>, transform_indices = @transform_2, window_bounds = array<i64: 128, 128>}, {pipeline_mode = #tpu.pipeline_mode<synchronous>, transform_indices = @transform_3, window_bounds = array<i64: 1, 128>}, {pipeline_mode = #tpu.pipeline_mode<synchronous>, transform_indices = @transform_4, window_bounds = array<i64: 128, 128>}, {pipeline_mode = #tpu.pipeline_mode<synchronous>, transform_indices = @transform_5, window_bounds = array<i64: 1, 128>}, {pipeline_mode = #tpu.pipeline_mode<synchronous>, transform_indices = @transform_6, window_bounds = array<i64: 128, 16>}, {transform_indices = @transform_7, window_bounds = array<i64: 32, 16>}]} {
    %c0_i32 = arith.constant 0 : i32
    %0 = arith.cmpi eq, %arg1, %c0_i32 : i32
    %1 = arith.extui %0 : i1 to i32
    %c0_i32_0 = arith.constant 0 : i32
    %2 = arith.cmpi ne, %1, %c0_i32_0 : i32
    scf.if %2 {
      %cst = arith.constant 0.000000e+00 : f32
      %11 = vector.broadcast %cst : f32 to vector<32x128xf32>
      %c0 = arith.constant 0 : index
      %c0_4 = arith.constant 0 : index
      %12 = vector.load %arg12[%c0, %c0_4] : memref<32x128xf32, #tpu.memory_space<vmem>>, vector<32x128xf32>
      tpu.vector_store %arg12[%c0, %c0_4], %11 {strides = array<i32>} : memref<32x128xf32, #tpu.memory_space<vmem>>, vector<32x128xf32>,
    } else {
    }
    %3 = arith.index_cast %arg0 : i32 to index
    %4 = memref.load %arg3[%3] : memref<2xi32, #tpu.memory_space<smem>>
    %5 = arith.cmpi slt, %arg1, %4 : i32
    %6 = arith.extui %5 : i1 to i32
    %c0_i32_1 = arith.constant 0 : i32
    %7 = arith.cmpi ne, %6, %c0_i32_1 : i32
    scf.if %7 {
      %c0 = arith.constant 0 : index
      %c0_4 = arith.constant 0 : index
      %11 = vector.load %arg4[%c0, %c0_4] : memref<1x256xi32, #tpu.memory_space<vmem>>, vector<1x256xi32>
      %c32_i32 = arith.constant 32 : i32
      %12 = arith.muli %arg0, %c32_i32 : i32
      %13 = vector.broadcast %12 : i32 to vector<1x256xi32>
      %14 = arith.subi %11, %13 : vector<1x256xi32>
      %15 = tpu.iota {dimensions = array<i32: 0>} : vector<32x1xi32>
      %16 = vector.broadcast %14 : vector<1x256xi32> to vector<32x256xi32>
      %17 = vector.broadcast %15 : vector<32x1xi32> to vector<32x256xi32>
      %18 = arith.cmpi eq, %16, %17 : vector<32x256xi32>
      %19 = arith.extui %18 : vector<32x256xi1> to vector<32x256xi32>
      %20 = arith.sitofp %19 : vector<32x256xi32> to vector<32x256xf32>
      %21 = arith.truncf %20 : vector<32x256xf32> to vector<32x256xbf16>
      %c0_5 = arith.constant 0 : index
      %c0_6 = arith.constant 0 : index
      %22 = vector.load %arg12[%c0_5, %c0_6] : memref<32x128xf32, #tpu.memory_space<vmem>>, vector<32x128xf32>
      %c0_7 = arith.constant 0 : index
      %c0_8 = arith.constant 0 : index
      %23 = vector.load %arg5[%c0_7, %c0_8] : memref<256x128xbf16, #tpu.memory_space<vmem>>, vector<256x128xbf16>
      %cst = arith.constant dense<0.000000e+00> : vector<32x128xf32>
      %24 = tpu.matmul %21, %23, %cst {dimension_numbers = #tpu.dot_dimension_numbers<[1], [0], [0], [1], [0, 0, 1, 1], [], []>} : vector<32x256xbf16>, vector<256x128xbf16>, vector<32x128xf32> -> vector<32x128xf32>
      %25 = arith.addf %22, %24 : vector<32x128xf32>
      %c0_9 = arith.constant 0 : index
      %c0_10 = arith.constant 0 : index
      %26 = vector.load %arg12[%c0_9, %c0_10] : memref<32x128xf32, #tpu.memory_space<vmem>>, vector<32x128xf32>
      tpu.vector_store %arg12[%c0_9, %c0_10], %25 {strides = array<i32>} : memref<32x128xf32, #tpu.memory_space<vmem>>, vector<32x128xf32>,
    } else {
    }
    %c0_i32_2 = arith.constant 0 : i32
    %8 = arith.cmpi eq, %arg1, %c0_i32_2 : i32
    %9 = arith.extui %8 : i1 to i32
    %c0_i32_3 = arith.constant 0 : i32
    %10 = arith.cmpi ne, %9, %c0_i32_3 : i32
    scf.if %10 {
      %c0 = arith.constant 0 : index
      %c0_4 = arith.constant 0 : index
      %11 = vector.load %arg12[%c0, %c0_4] : memref<32x128xf32, #tpu.memory_space<vmem>>, vector<32x128xf32>
      %c0_5 = arith.constant 0 : index
      %c0_6 = arith.constant 0 : index
      %12 = vector.load %arg6[%c0_5, %c0_6] : memref<128x128xbf16, #tpu.memory_space<vmem>>, vector<128x128xbf16>
      %c0_7 = arith.constant 0 : index
      %c0_8 = arith.constant 0 : index
      %13 = vector.load %arg7[%c0_7, %c0_8] : memref<1x128xf32, #tpu.memory_space<vmem>>, vector<1x128xf32>
      %14 = arith.truncf %11 : vector<32x128xf32> to vector<32x128xbf16>
      %cst = arith.constant dense<0.000000e+00> : vector<32x128xf32>
      %15 = tpu.matmul %14, %12, %cst {dimension_numbers = #tpu.dot_dimension_numbers<[1], [0], [0], [1], [0, 0, 1, 1], [], []>} : vector<32x128xbf16>, vector<128x128xbf16>, vector<32x128xf32> -> vector<32x128xf32>
      %16 = vector.broadcast %13 : vector<1x128xf32> to vector<32x128xf32>
      %17 = arith.addf %15, %16 : vector<32x128xf32>
      %18 = arith.negf %17 : vector<32x128xf32>
      %19 = math.exp %18 : vector<32x128xf32>
      %cst_9 = arith.constant 1.000000e+00 : f32
      %20 = vector.broadcast %cst_9 : f32 to vector<32x128xf32>
      %21 = arith.addf %20, %19 : vector<32x128xf32>
      %22 = arith.divf %20, %21 : vector<32x128xf32>
      %23 = arith.mulf %17, %22 : vector<32x128xf32>
      %c0_10 = arith.constant 0 : index
      %c0_11 = arith.constant 0 : index
      %24 = vector.load %arg8[%c0_10, %c0_11] : memref<128x128xbf16, #tpu.memory_space<vmem>>, vector<128x128xbf16>
      %c0_12 = arith.constant 0 : index
      %c0_13 = arith.constant 0 : index
      %25 = vector.load %arg9[%c0_12, %c0_13] : memref<1x128xf32, #tpu.memory_space<vmem>>, vector<1x128xf32>
      %26 = arith.truncf %23 : vector<32x128xf32> to vector<32x128xbf16>
      %cst_14 = arith.constant dense<0.000000e+00> : vector<32x128xf32>
      %27 = tpu.matmul %26, %24, %cst_14 {dimension_numbers = #tpu.dot_dimension_numbers<[1], [0], [0], [1], [0, 0, 1, 1], [], []>} : vector<32x128xbf16>, vector<128x128xbf16>, vector<32x128xf32> -> vector<32x128xf32>
      %28 = vector.broadcast %25 : vector<1x128xf32> to vector<32x128xf32>
      %29 = arith.addf %27, %28 : vector<32x128xf32>
      %30 = arith.negf %29 : vector<32x128xf32>
      %31 = math.exp %30 : vector<32x128xf32>
      %cst_15 = arith.constant 1.000000e+00 : f32
      %32 = vector.broadcast %cst_15 : f32 to vector<32x128xf32>
      %33 = arith.addf %32, %31 : vector<32x128xf32>
      %34 = arith.divf %32, %33 : vector<32x128xf32>
      %35 = arith.mulf %29, %34 : vector<32x128xf32>
      %36 = arith.truncf %35 : vector<32x128xf32> to vector<32x128xbf16>
      %c0_16 = arith.constant 0 : index
      %c0_17 = arith.constant 0 : index
      %37 = vector.load %arg10[%c0_16, %c0_17] : memref<128x16xbf16, #tpu.memory_space<vmem>>, vector<128x16xbf16>
      %cst_18 = arith.constant dense<0.000000e+00> : vector<32x16xf32>
      %38 = tpu.matmul %36, %37, %cst_18 {dimension_numbers = #tpu.dot_dimension_numbers<[1], [0], [0], [1], [0, 0, 1, 1], [], []>} : vector<32x128xbf16>, vector<128x16xbf16>, vector<32x16xf32> -> vector<32x16xf32>
      %c0_19 = arith.constant 0 : index
      %c0_20 = arith.constant 0 : index
      %39 = vector.load %arg11[%c0_19, %c0_20] : memref<32x16xf32, #tpu.memory_space<vmem>>, vector<32x16xf32>
      tpu.vector_store %arg11[%c0_19, %c0_20], %38 {strides = array<i32>} : memref<32x16xf32, #tpu.memory_space<vmem>>, vector<32x16xf32>,
    } else {
    }
    return
  }
  func.func @transform_0(%arg0: i32, %arg1: i32, %arg2: memref<2xi32, #tpu.memory_space<smem>>, %arg3: memref<2xi32, #tpu.memory_space<smem>>) -> (i32, i32) {
    %0 = arith.index_cast %arg0 : i32 to index
    %1 = memref.load %arg2[%0] : memref<2xi32, #tpu.memory_space<smem>>
    %2 = arith.index_cast %arg0 : i32 to index
    %3 = memref.load %arg3[%2] : memref<2xi32, #tpu.memory_space<smem>>
    %c1_i32 = arith.constant 1 : i32
    %4 = arith.maxsi %3, %c1_i32 : i32
    %5 = arith.addi %1, %4 : i32
    %c1_i32_0 = arith.constant 1 : i32
    %6 = arith.subi %5, %c1_i32_0 : i32
    %7 = arith.index_cast %arg0 : i32 to index
    %8 = memref.load %arg2[%7] : memref<2xi32, #tpu.memory_space<smem>>
    %9 = arith.addi %8, %arg1 : i32
    %10 = arith.minsi %9, %6 : i32
    %c0_i32 = arith.constant 0 : i32
    %c0_i32_1 = arith.constant 0 : i32
    return %c0_i32, %10 : i32, i32
  }
  func.func @transform_1(%arg0: i32, %arg1: i32, %arg2: memref<2xi32, #tpu.memory_space<smem>>, %arg3: memref<2xi32, #tpu.memory_space<smem>>) -> (i32, i32) {
    %0 = arith.index_cast %arg0 : i32 to index
    %1 = memref.load %arg2[%0] : memref<2xi32, #tpu.memory_space<smem>>
    %2 = arith.index_cast %arg0 : i32 to index
    %3 = memref.load %arg3[%2] : memref<2xi32, #tpu.memory_space<smem>>
    %c1_i32 = arith.constant 1 : i32
    %4 = arith.maxsi %3, %c1_i32 : i32
    %5 = arith.addi %1, %4 : i32
    %c1_i32_0 = arith.constant 1 : i32
    %6 = arith.subi %5, %c1_i32_0 : i32
    %7 = arith.index_cast %arg0 : i32 to index
    %8 = memref.load %arg2[%7] : memref<2xi32, #tpu.memory_space<smem>>
    %9 = arith.addi %8, %arg1 : i32
    %10 = arith.minsi %9, %6 : i32
    %c0_i32 = arith.constant 0 : i32
    %c0_i32_1 = arith.constant 0 : i32
    return %10, %c0_i32 : i32, i32
  }
  func.func @transform_2(%arg0: i32, %arg1: i32, %arg2: memref<2xi32, #tpu.memory_space<smem>>, %arg3: memref<2xi32, #tpu.memory_space<smem>>) -> (i32, i32) {
    %c0_i32 = arith.constant 0 : i32
    %c0_i32_0 = arith.constant 0 : i32
    %c0_i32_1 = arith.constant 0 : i32
    return %c0_i32, %c0_i32_0 : i32, i32
  }
  func.func @transform_3(%arg0: i32, %arg1: i32, %arg2: memref<2xi32, #tpu.memory_space<smem>>, %arg3: memref<2xi32, #tpu.memory_space<smem>>) -> (i32, i32) {
    %c0_i32 = arith.constant 0 : i32
    %c0_i32_0 = arith.constant 0 : i32
    %c0_i32_1 = arith.constant 0 : i32
    return %c0_i32, %c0_i32_0 : i32, i32
  }
  func.func @transform_4(%arg0: i32, %arg1: i32, %arg2: memref<2xi32, #tpu.memory_space<smem>>, %arg3: memref<2xi32, #tpu.memory_space<smem>>) -> (i32, i32) {
    %c0_i32 = arith.constant 0 : i32
    %c0_i32_0 = arith.constant 0 : i32
    %c0_i32_1 = arith.constant 0 : i32
    return %c0_i32, %c0_i32_0 : i32, i32
  }
  func.func @transform_5(%arg0: i32, %arg1: i32, %arg2: memref<2xi32, #tpu.memory_space<smem>>, %arg3: memref<2xi32, #tpu.memory_space<smem>>) -> (i32, i32) {
    %c0_i32 = arith.constant 0 : i32
    %c0_i32_0 = arith.constant 0 : i32
    %c0_i32_1 = arith.constant 0 : i32
    return %c0_i32, %c0_i32_0 : i32, i32
  }
  func.func @transform_6(%arg0: i32, %arg1: i32, %arg2: memref<2xi32, #tpu.memory_space<smem>>, %arg3: memref<2xi32, #tpu.memory_space<smem>>) -> (i32, i32) {
    %c0_i32 = arith.constant 0 : i32
    %c0_i32_0 = arith.constant 0 : i32
    %c0_i32_1 = arith.constant 0 : i32
    return %c0_i32, %c0_i32_0 : i32, i32
  }
  func.func @transform_7(%arg0: i32, %arg1: i32, %arg2: memref<2xi32, #tpu.memory_space<smem>>, %arg3: memref<2xi32, #tpu.memory_space<smem>>) -> (i32, i32) {
    %c0_i32 = arith.constant 0 : i32
    %c0_i32_0 = arith.constant 0 : i32
    return %arg0, %c0_i32 : i32, i32
  }
}

</mosaic_0001>

<llo_original>
// kernel: tpu_custom_call.1
$region0: #{tpu_custom_call.1}
  #allocation0 [shape = 'u32[]', space=smem, size = 0x4, offset = 0x4, fixed_abs, tag = 'smem constant byte address 0x4 - core index']
  #allocation1 [shape = 'u32[144,128]{1,0:T(1,128)}', space=vmem, size = 0x12000, scoped, tag = 'internal scratch']
  #allocation2 [shape = 'f32[32,128]{1,0:T(8,128)}', space=vmem, size = 0x4000, scoped, tag = 'scratch operand']
  #allocation3 [shape = 's32[1]{0}', space=sflag, size = 0x4, scoped, tag = 'scoped memory for tpu_custom_call.1']
  #allocation4 [shape = 'u8[512]{0}', space=smem, size = 0x200, scoped, tag = 'prefetched SMEM operand 0']
  #allocation5 [shape = 'u8[512]{0}', space=smem, size = 0x200, scoped, tag = 'prefetched SMEM operand 1']
  %s0 = inlined_call_operand.vmem [shape: s32[2], index: 0, kind: input, shape index: {}]
  %s1 = inlined_call_operand.vmem [shape: s32[2], index: 1, kind: input, shape index: {}]
  %s2 = inlined_call_operand.vmem [shape: s32[1,256], index: 2, kind: input, shape index: {}]
  %s3 = inlined_call_operand.hbm [shape: bf16[256,128], index: 3, kind: input, shape index: {}]
  %s4 = inlined_call_operand.vmem [shape: bf16[128,128], index: 4, kind: input, shape index: {}]
  %s5 = inlined_call_operand.vmem [shape: f32[1,128], index: 5, kind: input, shape index: {}]
  %s6 = inlined_call_operand.hbm [shape: bf16[128,128], index: 6, kind: input, shape index: {}]
  %s7 = inlined_call_operand.vmem [shape: f32[1,128], index: 7, kind: input, shape index: {}]
  %s8 = inlined_call_operand.vmem [shape: bf16[128,16], index: 8, kind: input, shape index: {}]
  %s9 = inlined_call_operand.vmem [shape: f32[64,16], index: 9, kind: output, shape index: {}]
  %s10 = sld [smem:[#allocation0]]
  $region81: #{tpu_custom_call.1} parent=0
    _
  %s12 = ssub.s32 1, %s10
  %s13 = scalar_select 0, %s12, %s10
  %s14 = sshll.u32 %s0, 4
  %s15 = int_to_ptr.vmem [resolvable:$true] %s14
  %17 = dma.vmem_to_smem %s15, 16, [#allocation4], [#allocation3]
  %s18 = sshll.u32 %s1, 4
  %s19 = int_to_ptr.vmem [resolvable:$true] %s18
  %21 = dma.vmem_to_smem %s19, 16, [#allocation5], [#allocation3]
  %22 = dma.done [#allocation3], 32
  %23 = sfence
  $region1: #{tpu_custom_call.1} parent=0
    #allocation6 [shape = 'u8[131072]{0}', space=vmem, size = 0x20000, scoped, tag = 'input window, operand 3']
    #allocation7 [shape = 's32[2]{0}', space=sflag, size = 0x8, scoped, tag = 'scoped memory for tpu_custom_call.1']
    #allocation8 [shape = 'u8[32768]{0}', space=vmem, size = 0x8000, scoped, tag = 'input window, operand 6, single buffered']
    #allocation9 [shape = 's32[1]{0}', space=sflag, size = 0x4, scoped, tag = 'scoped memory for tpu_custom_call.1']
    %24 = vsyncpa [#allocation7], 0
    %s25 = scalar_lea.sflag [#allocation7], 1
    %26 = vsyncpa %s25, 0
    %27 = vsyncpa [#allocation9], 0
    loop: start=0, step=1, limit=4
    $region2: #{tpu_custom_call.1} parent=1 // loop_pre_header
      _
    $region3: #{tpu_custom_call.1} parent=1 // loop_header
      %s29 = sphi 0, %s33
      %p30 = scmp.ge.s32.totalorder %s29, 4
      %s36 = sphi 0, %s48
      %s37 = sphi 0, %s44
      %s38 = sphi 0, %s36
      %s39 = sphi 0, %s37
      %s40 = sphi 0, %s38
      %s41 = sphi 0, %s39
      %s69 = sphi 0, %s71
      %s72 = sphi 0, %s69
      %s73 = sphi 0, %s72
      %s89 = sphi 0, %s73
      %s113 = sphi 0, %s115
      %s116 = sphi 0, %s113
      %s117 = sphi 0, %s116
      %s133 = sphi 0, %s117
      %s137 = sphi 0, %s137
      %s139 = sphi 0, %s137
      %s140 = sphi 0, %s139
      %s154 = sphi 0, %s140
      %s158 = sphi 0, %s158
      %s160 = sphi 0, %s158
      %s161 = sphi 0, %s160
      %s175 = sphi 0, %s161
      %s179 = sphi 0, %s179
      %s181 = sphi 0, %s179
      %s182 = sphi 0, %s181
      %s196 = sphi 0, %s182
      %s200 = sphi 0, %s200
      %s202 = sphi 0, %s200
      %s203 = sphi 0, %s202
      %s217 = sphi 0, %s203
      %s221 = sphi 0, %s221
      %s223 = sphi 0, %s221
      %s224 = sphi 0, %s223
      %s238 = sphi 0, %s224
      %s244 = sphi 0, %s246
      %s247 = sphi 0, %s244
      %s248 = sphi 0, %s247
      %s264 = sphi 0, %s248
    $region4: #{tpu_custom_call.1} parent=1 // loop_header_branch
      %32 = sbr.rel (%p30) target = $region8
    $region5: #{tpu_custom_call.1} parent=1 // loop_body
      %s34 = ssub.s32 %s29, 1
      %s35 = ssub.s32 %s29, 2
      %s42 = sadd.s32 1, %s37
      %p43 = scmp.ge.s32.totalorder %s42, 1
      %s44 = scalar_select %p43, 0, %s42
      %s45 = sadd.s32 1, %s36
      %s46 = scalar_select %p43, %s45, %s36
      %p47 = scmp.ge.s32.totalorder %s46, 2
      %s48 = scalar_select %p47, 0, %s46
      %s49 = sld [smem:[#allocation4 + %s36]]
      %s50 = sld [smem:[#allocation5 + %s36]]
      %p51 = scmp.gt.s32.totalorder %s50, 1
      %s52 = scalar_select %p51, %s50, 1
      %s53 = sadd.s32 %s49, %s52
      %s54 = ssub.s32 %s53, 1
      %s55 = sadd.s32 %s49, %s37
      %p56 = scmp.lt.s32.totalorder %s55, %s54
      %s57 = scalar_select %p56, %s55, %s54
      %s58 = sld [smem:[#allocation4 + %s48]]
      %s59 = sld [smem:[#allocation5 + %s48]]
      %p60 = scmp.gt.s32.totalorder %s59, 1
      %s61 = scalar_select %p60, %s59, 1
      %s62 = sadd.s32 %s58, %s61
      %s63 = ssub.s32 %s62, 1
      %s64 = sadd.s32 %s58, %s44
      %p65 = scmp.lt.s32.totalorder %s64, %s63
      %s66 = scalar_select %p65, %s64, %s63
      %s67 = ssub.s32 %s57, %s66
      %p68 = scmp.eq.s32.totalorder %s67, 0
      %s70 = sadd.s32 %s69, 1
      %s71 = scalar_select %p68, %s69, %s70
      %p74 = pneg %p68
      %p75 = scmp.eq.s32.totalorder %s29, 1
      %p76 = por %p74, %p75
      %p77 = scmp.ne.s32.totalorder %s69, %s72
      %p78 = scmp.eq.s32.totalorder %s29, 0
      %p79 = por %p77, %p78
      %p80 = scmp.ne.s32.totalorder %s69, %s72
      %p81 = scmp.eq.s32.totalorder %s34, 1
      %p82 = por %p80, %p81
      %p83 = scmp.ne.s32.totalorder %s72, %s73
      %p84 = scmp.eq.s32.totalorder %s34, 0
      %p85 = por %p83, %p84
      %p86 = scmp.ne.s32.totalorder %s72, %s73
      %p87 = scmp.eq.s32.totalorder %s35, 1
      %p88 = por %p86, %p87
      %p90 = scmp.ne.s32.totalorder %s73, %s89
      %p91 = scmp.eq.s32.totalorder %s35, 0
      %p92 = por %p90, %p91
      %s93 = sld [smem:[#allocation4 + %s36]]
      %s94 = sld [smem:[#allocation5 + %s36]]
      %p95 = scmp.gt.s32.totalorder %s94, 1
      %s96 = scalar_select %p95, %s94, 1
      %s97 = sadd.s32 %s93, %s96
      %s98 = ssub.s32 %s97, 1
      %s99 = sadd.s32 %s93, %s37
      %p100 = scmp.lt.s32.totalorder %s99, %s98
      %s101 = scalar_select %p100, %s99, %s98
      %s102 = sld [smem:[#allocation4 + %s48]]
      %s103 = sld [smem:[#allocation5 + %s48]]
      %p104 = scmp.gt.s32.totalorder %s103, 1
      %s105 = scalar_select %p104, %s103, 1
      %s106 = sadd.s32 %s102, %s105
      %s107 = ssub.s32 %s106, 1
      %s108 = sadd.s32 %s102, %s44
      %p109 = scmp.lt.s32.totalorder %s108, %s107
      %s110 = scalar_select %p109, %s108, %s107
      %s111 = ssub.s32 %s101, %s110
      %p112 = scmp.eq.s32.totalorder %s111, 0
      %s114 = sadd.s32 %s113, 1
      %s115 = scalar_select %p112, %s113, %s114
      %p118 = pneg %p112
      %p119 = scmp.eq.s32.totalorder %s29, 1
      %p120 = por %p118, %p119
      %p121 = scmp.ne.s32.totalorder %s113, %s116
      %p122 = scmp.eq.s32.totalorder %s29, 0
      %p123 = por %p121, %p122
      %p124 = scmp.ne.s32.totalorder %s113, %s116
      %p125 = scmp.eq.s32.totalorder %s34, 1
      %p126 = por %p124, %p125
      %p127 = scmp.ne.s32.totalorder %s116, %s117
      %p128 = scmp.eq.s32.totalorder %s34, 0
      %p129 = por %p127, %p128
      %p130 = scmp.ne.s32.totalorder %s116, %s117
      %p131 = scmp.eq.s32.totalorder %s35, 1
      %p132 = por %p130, %p131
      %p134 = scmp.ne.s32.totalorder %s117, %s133
      %p135 = scmp.eq.s32.totalorder %s35, 0
      %p136 = por %p134, %p135
      %s138 = sadd.s32 %s137, 1
      %p141 = scmp.eq.s32.totalorder %s29, 1
      %p142 = scmp.ne.s32.totalorder %s137, %s139
      %p143 = scmp.eq.s32.totalorder %s29, 0
      %p144 = por %p142, %p143
      %p145 = scmp.ne.s32.totalorder %s137, %s139
      %p146 = scmp.eq.s32.totalorder %s34, 1
      %p147 = por %p145, %p146
      %p148 = scmp.ne.s32.totalorder %s139, %s140
      %p149 = scmp.eq.s32.totalorder %s34, 0
      %p150 = por %p148, %p149
      %p151 = scmp.ne.s32.totalorder %s139, %s140
      %p152 = scmp.eq.s32.totalorder %s35, 1
      %p153 = por %p151, %p152
      %p155 = scmp.ne.s32.totalorder %s140, %s154
      %p156 = scmp.eq.s32.totalorder %s35, 0
      %p157 = por %p155, %p156
      %s159 = sadd.s32 %s158, 1
      %p162 = scmp.eq.s32.totalorder %s29, 1
      %p163 = scmp.ne.s32.totalorder %s158, %s160
      %p164 = scmp.eq.s32.totalorder %s29, 0
      %p165 = por %p163, %p164
      %p166 = scmp.ne.s32.totalorder %s158, %s160
      %p167 = scmp.eq.s32.totalorder %s34, 1
      %p168 = por %p166, %p167
      %p169 = scmp.ne.s32.totalorder %s160, %s161
      %p170 = scmp.eq.s32.totalorder %s34, 0
      %p171 = por %p169, %p170
      %p172 = scmp.ne.s32.totalorder %s160, %s161
      %p173 = scmp.eq.s32.totalorder %s35, 1
      %p174 = por %p172, %p173
      %p176 = scmp.ne.s32.totalorder %s161, %s175
      %p177 = scmp.eq.s32.totalorder %s35, 0
      %p178 = por %p176, %p177
      %s180 = sadd.s32 %s179, 1
      %p183 = scmp.eq.s32.totalorder %s29, 1
      %p184 = scmp.ne.s32.totalorder %s179, %s181
      %p185 = scmp.eq.s32.totalorder %s29, 0
      %p186 = por %p184, %p185
      %p187 = scmp.ne.s32.totalorder %s179, %s181
      %p188 = scmp.eq.s32.totalorder %s34, 1
      %p189 = por %p187, %p188
      %p190 = scmp.ne.s32.totalorder %s181, %s182
      %p191 = scmp.eq.s32.totalorder %s34, 0
      %p192 = por %p190, %p191
      %p193 = scmp.ne.s32.totalorder %s181, %s182
      %p194 = scmp.eq.s32.totalorder %s35, 1
      %p195 = por %p193, %p194
      %p197 = scmp.ne.s32.totalorder %s182, %s196
      %p198 = scmp.eq.s32.totalorder %s35, 0
      %p199 = por %p197, %p198
      %s201 = sadd.s32 %s200, 1
      %p204 = scmp.eq.s32.totalorder %s29, 1
      %p205 = scmp.ne.s32.totalorder %s200, %s202
      %p206 = scmp.eq.s32.totalorder %s29, 0
      %p207 = por %p205, %p206
      %p208 = scmp.ne.s32.totalorder %s200, %s202
      %p209 = scmp.eq.s32.totalorder %s34, 1
      %p210 = por %p208, %p209
      %p211 = scmp.ne.s32.totalorder %s202, %s203
      %p212 = scmp.eq.s32.totalorder %s34, 0
      %p213 = por %p211, %p212
      %p214 = scmp.ne.s32.totalorder %s202, %s203
      %p215 = scmp.eq.s32.totalorder %s35, 1
      %p216 = por %p214, %p215
      %p218 = scmp.ne.s32.totalorder %s203, %s217
      %p219 = scmp.eq.s32.totalorder %s35, 0
      %p220 = por %p218, %p219
      %s222 = sadd.s32 %s221, 1
      %p225 = scmp.eq.s32.totalorder %s29, 1
      %p226 = scmp.ne.s32.totalorder %s221, %s223
      %p227 = scmp.eq.s32.totalorder %s29, 0
      %p228 = por %p226, %p227
      %p229 = scmp.ne.s32.totalorder %s221, %s223
      %p230 = scmp.eq.s32.totalorder %s34, 1
      %p231 = por %p229, %p230
      %p232 = scmp.ne.s32.totalorder %s223, %s224
      %p233 = scmp.eq.s32.totalorder %s34, 0
      %p234 = por %p232, %p233
      %p235 = scmp.ne.s32.totalorder %s223, %s224
      %p236 = scmp.eq.s32.totalorder %s35, 1
      %p237 = por %p235, %p236
      %p239 = scmp.ne.s32.totalorder %s224, %s238
      %p240 = scmp.eq.s32.totalorder %s35, 0
      %p241 = por %p239, %p240
      %s242 = ssub.s32 %s36, %s48
      %p243 = scmp.eq.s32.totalorder %s242, 0
      %s245 = sadd.s32 %s244, 1
      %s246 = scalar_select %p243, %s244, %s245
      %p249 = pneg %p243
      %p250 = scmp.eq.s32.totalorder %s29, 1
      %p251 = por %p249, %p250
      %p252 = scmp.ne.s32.totalorder %s244, %s247
      %p253 = scmp.eq.s32.totalorder %s29, 0
      %p254 = por %p252, %p253
      %p255 = scmp.ne.s32.totalorder %s244, %s247
      %p256 = scmp.eq.s32.totalorder %s34, 1
      %p257 = por %p255, %p256
      %p258 = scmp.ne.s32.totalorder %s247, %s248
      %p259 = scmp.eq.s32.totalorder %s34, 0
      %p260 = por %p258, %p259
      %p261 = scmp.ne.s32.totalorder %s247, %s248
      %p262 = scmp.eq.s32.totalorder %s35, 1
      %p263 = por %p261, %p262
      %p265 = scmp.ne.s32.totalorder %s248, %s264
      %p266 = scmp.eq.s32.totalorder %s35, 0
      %p267 = por %p265, %p266
      %p268 = scmp.le.s32.totalorder 1, %s29
      %p269 = scmp.lt.s32.totalorder %s29, 3
      %p270 = pnand %p268, %p269
      %p271 = pneg %p270
      // Predicated region
      $region9: #{tpu_custom_call.1} parent=5 // pred_check
        _
      $region10: #{tpu_custom_call.1} parent=5 // pred_check_branch
        %273 = sbr.rel (%p270) target = $region12
      $region11: #{tpu_custom_call.1} parent=5 // pred_region
        %s274 = ssub.s32 %s29, 1
        // Predicated region
        $region13: #{tpu_custom_call.1} parent=11 // pred_check
          %p275 = pneg %p150
        $region14: #{tpu_custom_call.1} parent=11 // pred_check_branch
          %277 = sbr.rel (%p275) target = $region16
        $region15: #{tpu_custom_call.1} parent=11 // pred_region
          _
        $region16: #{tpu_custom_call.1} parent=11 // pred_fallthru
          _
        // Predicated region
        $region17: #{tpu_custom_call.1} parent=11 // pred_check
          %p278 = pneg %p171
        $region18: #{tpu_custom_call.1} parent=11 // pred_check_branch
          %280 = sbr.rel (%p278) target = $region20
        $region19: #{tpu_custom_call.1} parent=11 // pred_region
          _
        $region20: #{tpu_custom_call.1} parent=11 // pred_fallthru
          _
        // Predicated region
        $region21: #{tpu_custom_call.1} parent=11 // pred_check
          %p281 = pneg %p192
        $region22: #{tpu_custom_call.1} parent=11 // pred_check_branch
          %283 = sbr.rel (%p281) target = $region24
        $region23: #{tpu_custom_call.1} parent=11 // pred_region
          %s285 = ssub.s32 1024, 1024
          %286 = vsyncadd [#allocation9], %s285
          %s287 = sshll.u32 [#allocation8], 4
          %s288 = int_to_ptr.vmem [resolvable:$true] %s287
          %293 = dma.hbm_to_vmem [thread:$0]  %s6, 1024, %s288, [#allocation9], 64, 64, 4
        $region24: #{tpu_custom_call.1} parent=11 // pred_fallthru
          _
        // Predicated region
        $region25: #{tpu_custom_call.1} parent=11 // pred_check
          %p294 = pneg %p213
        $region26: #{tpu_custom_call.1} parent=11 // pred_check_branch
          %296 = sbr.rel (%p294) target = $region28
        $region27: #{tpu_custom_call.1} parent=11 // pred_region
          _
        $region28: #{tpu_custom_call.1} parent=11 // pred_fallthru
          _
        // Predicated region
        $region29: #{tpu_custom_call.1} parent=11 // pred_check
          %p297 = pneg %p234
        $region30: #{tpu_custom_call.1} parent=11 // pred_check_branch
          %299 = sbr.rel (%p297) target = $region32
        $region31: #{tpu_custom_call.1} parent=11 // pred_region
          _
        $region32: #{tpu_custom_call.1} parent=11 // pred_fallthru
          _
      $region12: #{tpu_custom_call.1} parent=5 // pred_fallthru
        _
      %p300 = scmp.lt.s32.totalorder %s29, 2
      // Predicated region
      $region33: #{tpu_custom_call.1} parent=5 // pred_check
        %p301 = pneg %p300
      $region34: #{tpu_custom_call.1} parent=5 // pred_check_branch
        %303 = sbr.rel (%p301) target = $region36
      $region35: #{tpu_custom_call.1} parent=5 // pred_region
        // Predicated region
        $region37: #{tpu_custom_call.1} parent=35 // pred_check
          %p304 = pneg %p79
        $region38: #{tpu_custom_call.1} parent=35 // pred_check_branch
          %306 = sbr.rel (%p304) target = $region40
        $region39: #{tpu_custom_call.1} parent=35 // pred_region
          %s307 = sld [smem:[#allocation4 + %s36]]
          %s308 = sld [smem:[#allocation5 + %s36]]
          %p309 = scmp.gt.s32.totalorder %s308, 1
          %s310 = scalar_select %p309, %s308, 1
          %s311 = sadd.s32 %s307, %s310
          %s312 = ssub.s32 %s311, 1
          %s313 = sadd.s32 %s307, %s37
          %p314 = scmp.lt.s32.totalorder %s313, %s312
          %s315 = scalar_select %p314, %s313, %s312
          %s316 = smul.u32 2, %s315
          %p317 = scmp.lt.s32.totalorder %s316, 1
          %s318 = scalar_select %p317, %s316, 1
          %s319 = scalar_lea.vmem %s2, %s318
          %s320 = sld [smem:[#allocation4 + %s36]]
          %s321 = sld [smem:[#allocation5 + %s36]]
          %p322 = scmp.gt.s32.totalorder %s321, 1
          %s323 = scalar_select %p322, %s321, 1
          %s324 = sadd.s32 %s320, %s323
          %s325 = ssub.s32 %s324, 1
          %s326 = sadd.s32 %s320, %s37
          %p327 = scmp.lt.s32.totalorder %s326, %s325
          %s328 = scalar_select %p327, %s326, %s325
          %s329 = smul.u32 2, %s328
        $region40: #{tpu_custom_call.1} parent=35 // pred_fallthru
          _
        // Predicated region
        $region41: #{tpu_custom_call.1} parent=35 // pred_check
          %p330 = pneg %p123
        $region42: #{tpu_custom_call.1} parent=35 // pred_check_branch
          %332 = sbr.rel (%p330) target = $region44
        $region43: #{tpu_custom_call.1} parent=35 // pred_region
          %s333 = sand.u32 %s113, 1
          %s334 = scalar_lea.sflag [#allocation7], %s333
          %s335 = sand.u32 %s113, 1
          %s336 = smul.addr %s335, 128
          %s337 = scalar_lea.vmem [#allocation6], %s336
          %s338 = sld [smem:[#allocation4 + %s36]]
          %s339 = sld [smem:[#allocation5 + %s36]]
          %p340 = scmp.gt.s32.totalorder %s339, 1
          %s341 = scalar_select %p340, %s339, 1
          %s342 = sadd.s32 %s338, %s341
          %s343 = ssub.s32 %s342, 1
          %s344 = sadd.s32 %s338, %s37
          %p345 = scmp.lt.s32.totalorder %s344, %s343
          %s346 = scalar_select %p345, %s344, %s343
          %s347 = smul.u32 32, %s346
          %s349 = ssub.s32 2048, 2048
          %350 = vsyncadd %s334, %s349
          %s351 = smul.addr %s347, 64
          %s352 = scalar_lea.hbm %s3, %s351
          %s353 = sshll.u32 %s337, 4
          %s354 = int_to_ptr.vmem [resolvable:$true] %s353
          %359 = dma.hbm_to_vmem [thread:$0]  %s352, 2048, %s354, %s334, 64, 64, 4
        $region44: #{tpu_custom_call.1} parent=35 // pred_fallthru
          _
      $region36: #{tpu_custom_call.1} parent=5 // pred_fallthru
        _
      %p360 = scmp.le.s32.totalorder 1, %s29
      %p361 = scmp.lt.s32.totalorder %s29, 3
      %p362 = pnand %p360, %p361
      %p363 = pneg %p362
      // Predicated region
      $region45: #{tpu_custom_call.1} parent=5 // pred_check
        _
      $region46: #{tpu_custom_call.1} parent=5 // pred_check_branch
        %365 = sbr.rel (%p362) target = $region48
      $region47: #{tpu_custom_call.1} parent=5 // pred_region
        %s366 = ssub.s32 %s29, 1
        %s367 = sand.u32 %s116, 1
        %s368 = scalar_lea.sflag [#allocation7], %s367
        %s369 = sand.u32 %s116, 1
        %s370 = smul.addr %s369, 128
        %s371 = scalar_lea.vmem [#allocation6], %s370
        // Predicated region
        $region49: #{tpu_custom_call.1} parent=47 // pred_check
          %p372 = pneg %p129
        $region50: #{tpu_custom_call.1} parent=47 // pred_check_branch
          %374 = sbr.rel (%p372) target = $region52
        $region51: #{tpu_custom_call.1} parent=47 // pred_region
          %375 = dma.done %s368, 2048
        $region52: #{tpu_custom_call.1} parent=47 // pred_fallthru
          _
        // Predicated region
        $region53: #{tpu_custom_call.1} parent=47 // pred_check
          %p376 = pneg %p192
        $region54: #{tpu_custom_call.1} parent=47 // pred_check_branch
          %378 = sbr.rel (%p376) target = $region56
        $region55: #{tpu_custom_call.1} parent=47 // pred_region
          %379 = dma.done [#allocation9], 1024
        $region56: #{tpu_custom_call.1} parent=47 // pred_fallthru
          _
        %s380 = sld [smem:[#allocation4 + %s38]]
        %s381 = sld [smem:[#allocation5 + %s38]]
        %p382 = scmp.gt.s32.totalorder %s381, 1
        %s383 = scalar_select %p382, %s381, 1
        %s384 = sadd.s32 %s380, %s383
        %s385 = ssub.s32 %s384, 1
        %s386 = sadd.s32 %s380, %s39
        %p387 = scmp.lt.s32.totalorder %s386, %s385
        %s388 = scalar_select %p387, %s386, %s385
        %s389 = smul.u32 2, %s388
        %p390 = scmp.lt.s32.totalorder %s389, 1
        %s391 = scalar_select %p390, %s389, 1
        %s392 = scalar_lea.vmem %s2, %s391
        %p393 = pneg %p85
        %p394 = pneg %p82
        %s395 = sand.u32 %s116, 1
        %s396 = scalar_lea.sflag [#allocation7], %s395
        %s397 = sand.u32 %s116, 1
        %s398 = smul.addr %s397, 128
        %s399 = scalar_lea.vmem [#allocation6], %s398
        %p400 = pneg %p129
        %p401 = pneg %p126
        %p402 = pneg %p150
        %p403 = pneg %p147
        %p404 = pneg %p171
        %p405 = pneg %p168
        %p406 = pneg %p192
        %p407 = pneg %p189
        %p408 = pneg %p213
        %p409 = pneg %p210
        %p410 = pneg %p234
        %p411 = pneg %p231
        %p412 = pneg %p260
        %p413 = pneg %p257
        %s414 = smul.u32 4, %s38
        %p415 = scmp.lt.s32.totalorder %s414, 7
        %s416 = scalar_select %p415, %s414, 7
        %s417 = smul.addr %s416, 8
        %s418 = scalar_lea.vmem %s9, %s417
        %s419 = sld [smem:[#allocation4 + %s38]]
        %s420 = sld [smem:[#allocation5 + %s38]]
        %p421 = scmp.gt.s32.totalorder %s420, 1
        %s422 = scalar_select %p421, %s420, 1
        %s423 = sadd.s32 %s419, %s422
        %s424 = ssub.s32 %s423, 1
        %s425 = sadd.s32 %s419, %s39
        %p426 = scmp.lt.s32.totalorder %s425, %s424
        %s427 = scalar_select %p426, %s425, %s424
        %s428 = smul.u32 2, %s427
        %p429 = scmp.lt.s32.totalorder %s428, 1
        %s430 = scalar_select %p429, %s428, 1
        %s431 = scalar_lea.vmem %s2, %s430
        %s432 = sld [smem:[#allocation4 + %s38]]
        %s433 = sld [smem:[#allocation5 + %s38]]
        %p434 = scmp.gt.s32.totalorder %s433, 1
        %s435 = scalar_select %p434, %s433, 1
        %s436 = sadd.s32 %s432, %s435
        %s437 = ssub.s32 %s436, 1
        %s438 = sadd.s32 %s432, %s39
        %p439 = scmp.lt.s32.totalorder %s438, %s437
        %s440 = scalar_select %p439, %s438, %s437
        %s441 = smul.u32 2, %s440
        %s442 = sld [smem:[#allocation4 + %s38]]
        %s443 = sld [smem:[#allocation5 + %s38]]
        %p444 = scmp.gt.s32.totalorder %s443, 1
        %s445 = scalar_select %p444, %s443, 1
        %s446 = sadd.s32 %s442, %s445
        %s447 = ssub.s32 %s446, 1
        %s448 = sadd.s32 %s442, %s39
        %p449 = scmp.lt.s32.totalorder %s448, %s447
        %s450 = scalar_select %p449, %s448, %s447
        %s451 = smul.u32 32, %s450
        %s452 = smul.u32 4, %s38
        %p453 = scmp.lt.s32.totalorder %s452, 7
        %s454 = scalar_select %p453, %s452, 7
        %s455 = smul.addr %s454, 8
        %s456 = scalar_lea.vmem %s9, %s455
        %s457 = smul.u32 4, %s38
        %p459 = scmp.eq.s32.totalorder %s39, 0
        // Predicated region
        $region57: #{tpu_custom_call.1} parent=47 // pred_check
          %p460 = pneg %p459
        $region58: #{tpu_custom_call.1} parent=47 // pred_check_branch
          %462 = sbr.rel (%p460) target = $region60
        $region59: #{tpu_custom_call.1} parent=47 // pred_region
          %463 = vst [vmem:[#allocation2] sm:$0xff] 0.0
          %464 = vst [vmem:[#allocation2 + $0x8] sm:$0xff] 0.0
          %465 = vst [vmem:[#allocation2 + $0x10] sm:$0xff] 0.0
          %466 = vst [vmem:[#allocation2 + $0x18] sm:$0xff] 0.0
        $region60: #{tpu_custom_call.1} parent=47 // pred_fallthru
          _
        %s467 = sld [smem:[#allocation5 + %s38]]
        %p468 = scmp.lt.s32.totalorder %s39, %s467
        // Predicated region
        $region61: #{tpu_custom_call.1} parent=47 // pred_check
          %p469 = pneg %p468
        $region62: #{tpu_custom_call.1} parent=47 // pred_check_branch
          %471 = sbr.rel (%p469) target = $region64
        $region63: #{tpu_custom_call.1} parent=47 // pred_region
          %v472 = vld [vmem:[%s431] sm:$0x3]
          %s473 = smul.u32 %s38, 32
          %v474 = vstv %s473
          %v475 = vsub.s32 %v472, %v474
          %v476 = vlaneseq
          %v477 = vshrl.u32 %v476, 7
          %v478 = vadd.s32 %v477, 8
          %v479 = vadd.s32 %v477, 16
          %v480 = vadd.s32 %v477, 24
          %v481 = vlaneseq
          %v482 = vshrl.u32 %v481, 7
          %v483 = vsub.s32 0, %v482
          %v484 = vrot.slane %v475, %v483
          %v485 = vlaneseq
          %v486 = vshrl.u32 %v485, 7
          %v487 = vsub.s32 1, %v486
          %v488 = vrot.slane %v475, %v487
          %vm489 = vcmp.eq.s32.totalorder %v484, %v477
          %vm490 = vcmp.eq.s32.totalorder %v488, %v477
          %vm491 = vcmp.eq.s32.totalorder %v484, %v478
          %vm492 = vcmp.eq.s32.totalorder %v488, %v478
          %vm493 = vcmp.eq.s32.totalorder %v484, %v479
          %vm494 = vcmp.eq.s32.totalorder %v488, %v479
          %vm495 = vcmp.eq.s32.totalorder %v484, %v480
          %vm496 = vcmp.eq.s32.totalorder %v488, %v480
          %v497 = vsel %vm489, 1, 0
          %v498 = vsel %vm490, 1, 0
          %v499 = vsel %vm491, 1, 0
          %v500 = vsel %vm492, 1, 0
          %v501 = vsel %vm493, 1, 0
          %v502 = vsel %vm494, 1, 0
          %v503 = vsel %vm495, 1, 0
          %v504 = vsel %vm496, 1, 0
          %v505 = vcvt.s32.f32 %v497
          %v506 = vcvt.s32.f32 %v498
          %v507 = vcvt.s32.f32 %v499
          %v508 = vcvt.s32.f32 %v500
          %v509 = vcvt.s32.f32 %v501
          %v510 = vcvt.s32.f32 %v502
          %v511 = vcvt.s32.f32 %v503
          %v512 = vcvt.s32.f32 %v504
          %v513 = vpack.c.bf16 %v507, %v505
          %v514 = vpack.c.bf16 %v508, %v506
          %v515 = vpack.c.bf16 %v511, %v509
          %v516 = vpack.c.bf16 %v512, %v510
          %v517 = vld [vmem:[#allocation2] sm:$0xff]
          %v518 = vld [vmem:[#allocation2 + $0x8] sm:$0xff]
          %v519 = vld [vmem:[#allocation2 + $0x10] sm:$0xff]
          %v520 = vld [vmem:[#allocation2 + $0x18] sm:$0xff]
          %v521 = vld [vmem:[%s371] sm:$0xf]
          %v522 = vld [vmem:[%s371 + $0x4] sm:$0xf]
          %v523 = vld [vmem:[%s371 + $0x8] sm:$0xf]
          %v524 = vld [vmem:[%s371 + $0xc] sm:$0xf]
          %v525 = vld [vmem:[%s371 + $0x10] sm:$0xf]
          %v526 = vld [vmem:[%s371 + $0x14] sm:$0xf]
          %v527 = vld [vmem:[%s371 + $0x18] sm:$0xf]
          %v528 = vld [vmem:[%s371 + $0x1c] sm:$0xf]
          %v529 = vld [vmem:[%s371 + $0x20] sm:$0xf]
          %v530 = vld [vmem:[%s371 + $0x24] sm:$0xf]
          %v531 = vld [vmem:[%s371 + $0x28] sm:$0xf]
          %v532 = vld [vmem:[%s371 + $0x2c] sm:$0xf]
          %v533 = vld [vmem:[%s371 + $0x30] sm:$0xf]
          %v534 = vld [vmem:[%s371 + $0x34] sm:$0xf]
          %v535 = vld [vmem:[%s371 + $0x38] sm:$0xf]
          %v536 = vld [vmem:[%s371 + $0x3c] sm:$0xf]
          %v537 = vld [vmem:[%s371 + $0x40] sm:$0xf]
          %v538 = vld [vmem:[%s371 + $0x44] sm:$0xf]
          %v539 = vld [vmem:[%s371 + $0x48] sm:$0xf]
          %v540 = vld [vmem:[%s371 + $0x4c] sm:$0xf]
          %v541 = vld [vmem:[%s371 + $0x50] sm:$0xf]
          %v542 = vld [vmem:[%s371 + $0x54] sm:$0xf]
          %v543 = vld [vmem:[%s371 + $0x58] sm:$0xf]
          %v544 = vld [vmem:[%s371 + $0x5c] sm:$0xf]
          %v545 = vld [vmem:[%s371 + $0x60] sm:$0xf]
          %v546 = vld [vmem:[%s371 + $0x64] sm:$0xf]
          %v547 = vld [vmem:[%s371 + $0x68] sm:$0xf]
          %v548 = vld [vmem:[%s371 + $0x6c] sm:$0xf]
          %v549 = vld [vmem:[%s371 + $0x70] sm:$0xf]
          %v550 = vld [vmem:[%s371 + $0x74] sm:$0xf]
          %v551 = vld [vmem:[%s371 + $0x78] sm:$0xf]
          %v552 = vld [vmem:[%s371 + $0x7c] sm:$0xf]
          %v585 = vunpack.c.l.b16 %v521
          %v586 = vunpack.c.l.b16 %v522
          %v587 = vunpack.c.l.b16 %v523
          %v588 = vunpack.c.l.b16 %v524
          %v589 = vunpack.c.l.b16 %v525
          %v590 = vunpack.c.l.b16 %v526
          %v591 = vunpack.c.l.b16 %v527
          %v592 = vunpack.c.l.b16 %v528
          %v593 = vunpack.c.l.b16 %v529
          %v594 = vunpack.c.l.b16 %v530
          %v595 = vunpack.c.l.b16 %v531
          %v596 = vunpack.c.l.b16 %v532
          %v597 = vunpack.c.l.b16 %v533
          %v598 = vunpack.c.l.b16 %v534
          %v599 = vunpack.c.l.b16 %v535
          %v600 = vunpack.c.l.b16 %v536
          %v601 = vunpack.c.l.b16 %v537
          %v602 = vunpack.c.l.b16 %v538
          %v603 = vunpack.c.l.b16 %v539
          %v604 = vunpack.c.l.b16 %v540
          %v605 = vunpack.c.l.b16 %v541
          %v606 = vunpack.c.l.b16 %v542
          %v607 = vunpack.c.l.b16 %v543
          %v608 = vunpack.c.l.b16 %v544
          %v609 = vunpack.c.l.b16 %v545
          %v610 = vunpack.c.l.b16 %v546
          %v611 = vunpack.c.l.b16 %v547
          %v612 = vunpack.c.l.b16 %v548
          %v613 = vunpack.c.l.b16 %v549
          %v614 = vunpack.c.l.b16 %v550
          %v615 = vunpack.c.l.b16 %v551
          %v616 = vunpack.c.l.b16 %v552
          %v617 = vpack.c.b16 %v586, %v585
          %v618 = vpack.c.b16 %v588, %v587
          %v619 = vpack.c.b16 %v590, %v589
          %v620 = vpack.c.b16 %v592, %v591
          %v621 = vpack.c.b16 %v594, %v593
          %v622 = vpack.c.b16 %v596, %v595
          %v623 = vpack.c.b16 %v598, %v597
          %v624 = vpack.c.b16 %v600, %v599
          %v625 = vpack.c.b16 %v602, %v601
          %v626 = vpack.c.b16 %v604, %v603
          %v627 = vpack.c.b16 %v606, %v605
          %v628 = vpack.c.b16 %v608, %v607
          %v629 = vpack.c.b16 %v610, %v609
          %v630 = vpack.c.b16 %v612, %v611
          %v631 = vpack.c.b16 %v614, %v613
          %v632 = vpack.c.b16 %v616, %v615
          %649 = vmatprep.subr.bf16.mxu0 0
          %650 = vmatpush1.bf16.msra.mxu0 %v617
          %651 = vmatprep.subr.bf16.mxu0 0
          %652 = vmatpush1.bf16.msra.mxu0 %v618
          %653 = vmatprep.subr.bf16.mxu0 0
          %654 = vmatpush1.bf16.msra.mxu0 %v619
          %655 = vmatprep.subr.bf16.mxu0 0
          %656 = vmatpush1.bf16.msra.mxu0 %v620
          %657 = vmatprep.subr.bf16.mxu0 0
          %658 = vmatpush1.bf16.msra.mxu0 %v621
          %659 = vmatprep.subr.bf16.mxu0 0
          %660 = vmatpush1.bf16.msra.mxu0 %v622
          %661 = vmatprep.subr.bf16.mxu0 0
          %662 = vmatpush1.bf16.msra.mxu0 %v623
          %663 = vmatprep.subr.bf16.mxu0 0
          %664 = vmatpush1.bf16.msra.mxu0 %v624
          %665 = vmatprep.subr.bf16.mxu0 0
          %666 = vmatpush1.bf16.msra.mxu0 %v625
          %667 = vmatprep.subr.bf16.mxu0 0
          %668 = vmatpush1.bf16.msra.mxu0 %v626
          %669 = vmatprep.subr.bf16.mxu0 0
          %670 = vmatpush1.bf16.msra.mxu0 %v627
          %671 = vmatprep.subr.bf16.mxu0 0
          %672 = vmatpush1.bf16.msra.mxu0 %v628
          %673 = vmatprep.subr.bf16.mxu0 0
          %674 = vmatpush1.bf16.msra.mxu0 %v629
          %675 = vmatprep.subr.bf16.mxu0 0
          %676 = vmatpush1.bf16.msra.mxu0 %v630
          %677 = vmatprep.subr.bf16.mxu0 0
          %678 = vmatpush1.bf16.msra.mxu0 %v631
          %679 = vmatprep.subr.bf16.mxu0 0
          %680 = vmatpush1.bf16.msra.mxu0 %v632
          %681 = vmatprep.mubr.bf16.mxu0 %v514
          %682 = vmatmul.mubr.bf16.gmra.mrb[0].mxu0 %v513
          %v683 = vpop.f32.mrb[0].mxu0
          %v684 = vadd.f32 0.0, %v683
          %v685 = vpop.f32.mrb[0].mxu0
          %v686 = vpop.f32.mrb[0].mxu0
          %v687 = vadd.f32 0.0, %v686
          %v688 = vpop.f32.mrb[0].mxu0
          %689 = vmatprep.mubr.bf16.mxu0 %v516
          %690 = vmatmul.mubr.bf16.gmra.mrb[0].mxu0 %v515
          %v691 = vpop.f32.mrb[0].mxu0
          %v692 = vadd.f32 0.0, %v691
          %v693 = vpop.f32.mrb[0].mxu0
          %v694 = vpop.f32.mrb[0].mxu0
          %v695 = vadd.f32 0.0, %v694
          %v696 = vpop.f32.mrb[0].mxu0
          %697 = vdwg.mxu0
          %v698 = vadd.f32 %v517, %v684
          %v699 = vadd.f32 %v518, %v687
          %v700 = vadd.f32 %v519, %v692
          %v701 = vadd.f32 %v520, %v695
          %702 = vst [vmem:[#allocation2] sm:$0xff] %v698
          %703 = vst [vmem:[#allocation2 + $0x8] sm:$0xff] %v699
          %704 = vst [vmem:[#allocation2 + $0x10] sm:$0xff] %v700
          %705 = vst [vmem:[#allocation2 + $0x18] sm:$0xff] %v701
        $region64: #{tpu_custom_call.1} parent=47 // pred_fallthru
          _
        // Predicated region
        $region65: #{tpu_custom_call.1} parent=47 // pred_check
          %p706 = pneg %p459
        $region66: #{tpu_custom_call.1} parent=47 // pred_check_branch
          %708 = sbr.rel (%p706) target = $region68
        $region67: #{tpu_custom_call.1} parent=47 // pred_region
          %v709 = vld [vmem:[#allocation2] sm:$0xff]
          %v710 = vld [vmem:[#allocation2 + $0x8] sm:$0xff]
          %v711 = vld [vmem:[#allocation2 + $0x10] sm:$0xff]
          %v712 = vld [vmem:[#allocation2 + $0x18] sm:$0xff]
          %v713 = vld [vmem:[%s4] sm:$0xf]
          %v714 = vld [vmem:[%s4 + $0x4] sm:$0xf]
          %v715 = vld [vmem:[%s4 + $0x8] sm:$0xf]
          %v716 = vld [vmem:[%s4 + $0xc] sm:$0xf]
          %v717 = vld [vmem:[%s4 + $0x10] sm:$0xf]
          %v718 = vld [vmem:[%s4 + $0x14] sm:$0xf]
          %v719 = vld [vmem:[%s4 + $0x18] sm:$0xf]
          %v720 = vld [vmem:[%s4 + $0x1c] sm:$0xf]
          %v721 = vld [vmem:[%s4 + $0x20] sm:$0xf]
          %v722 = vld [vmem:[%s4 + $0x24] sm:$0xf]
          %v723 = vld [vmem:[%s4 + $0x28] sm:$0xf]
          %v724 = vld [vmem:[%s4 + $0x2c] sm:$0xf]
          %v725 = vld [vmem:[%s4 + $0x30] sm:$0xf]
          %v726 = vld [vmem:[%s4 + $0x34] sm:$0xf]
          %v727 = vld [vmem:[%s4 + $0x38] sm:$0xf]
          %v728 = vld [vmem:[%s4 + $0x3c] sm:$0xf]
          %v729 = vld [vmem:[%s5] sm:$0x1]
          %v730 = vpack.c.bf16 %v710, %v709
          %v731 = vpack.c.bf16 %v712, %v711
          %v733 = vlaneseq
          %v734 = vshrl.u32 %v733, 7
          %v735 = vsub.s32 0, %v734
          %v736 = vrot.slane %v729, %v735
          %v754 = vunpack.c.l.b16 %v713
          %v755 = vunpack.c.l.b16 %v714
          %v756 = vunpack.c.l.b16 %v715
          %v757 = vunpack.c.l.b16 %v716
          %v758 = vunpack.c.l.b16 %v717
          %v759 = vunpack.c.l.b16 %v718
          %v760 = vunpack.c.l.b16 %v719
          %v761 = vunpack.c.l.b16 %v720
          %v762 = vunpack.c.l.b16 %v721
          %v763 = vunpack.c.l.b16 %v722
          %v764 = vunpack.c.l.b16 %v723
          %v765 = vunpack.c.l.b16 %v724
          %v766 = vunpack.c.l.b16 %v725
          %v767 = vunpack.c.l.b16 %v726
          %v768 = vunpack.c.l.b16 %v727
          %v769 = vunpack.c.l.b16 %v728
          %v770 = vpack.c.b16 %v755, %v754
          %v771 = vpack.c.b16 %v757, %v756
          %v772 = vpack.c.b16 %v759, %v758
          %v773 = vpack.c.b16 %v761, %v760
          %v774 = vpack.c.b16 %v763, %v762
          %v775 = vpack.c.b16 %v765, %v764
          %v776 = vpack.c.b16 %v767, %v766
          %v777 = vpack.c.b16 %v769, %v768
          %786 = vmatprep.subr.bf16.mxu0 0
          %787 = vmatpush1.bf16.msra.mxu0 %v770
          %788 = vmatprep.subr.bf16.mxu0 0
          %789 = vmatpush1.bf16.msra.mxu0 %v771
          %790 = vmatprep.subr.bf16.mxu0 0
          %791 = vmatpush1.bf16.msra.mxu0 %v772
          %792 = vmatprep.subr.bf16.mxu0 0
          %793 = vmatpush1.bf16.msra.mxu0 %v773
          %794 = vmatprep.subr.bf16.mxu0 0
          %795 = vmatpush1.bf16.msra.mxu0 %v774
          %796 = vmatprep.subr.bf16.mxu0 0
          %797 = vmatpush1.bf16.msra.mxu0 %v775
          %798 = vmatprep.subr.bf16.mxu0 0
          %799 = vmatpush1.bf16.msra.mxu0 %v776
          %800 = vmatprep.subr.bf16.mxu0 0
          %801 = vmatpush1.bf16.msra.mxu0 %v777
          %802 = vmatprep.subr.bf16.mxu0 0
          %803 = vmatpush1.bf16.msra.mxu0 0
          %804 = vmatprep.subr.bf16.mxu0 0
          %805 = vmatpush1.bf16.msra.mxu0 0
          %806 = vmatprep.subr.bf16.mxu0 0
          %807 = vmatpush1.bf16.msra.mxu0 0
          %808 = vmatprep.subr.bf16.mxu0 0
          %809 = vmatpush1.bf16.msra.mxu0 0
          %810 = vmatprep.subr.bf16.mxu0 0
          %811 = vmatpush1.bf16.msra.mxu0 0
          %812 = vmatprep.subr.bf16.mxu0 0
          %813 = vmatpush1.bf16.msra.mxu0 0
          %814 = vmatprep.subr.bf16.mxu0 0
          %815 = vmatpush1.bf16.msra.mxu0 0
          %816 = vmatprep.subr.bf16.mxu0 0
          %817 = vmatpush1.bf16.msra.mxu0 0
          %818 = vmatprep.mubr.bf16.mxu0 0
          %819 = vmatmul.mubr.bf16.gmra.mrb[0].mxu0 %v730
          %v820 = vpop.f32.mrb[0].mxu0
          %v821 = vadd.f32 %v736, %v820
          %v822 = vpop.f32.mrb[0].mxu0
          %v823 = vpop.f32.mrb[0].mxu0
          %v824 = vadd.f32 %v736, %v823
          %v825 = vpop.f32.mrb[0].mxu0
          %826 = vmatprep.mubr.bf16.mxu0 0
          %827 = vmatmul.mubr.bf16.gmra.mrb[0].mxu0 %v731
          %v828 = vpop.f32.mrb[0].mxu0
          %v829 = vadd.f32 %v736, %v828
          %v830 = vpop.f32.mrb[0].mxu0
          %v831 = vpop.f32.mrb[0].mxu0
          %v832 = vadd.f32 %v736, %v831
          %v833 = vpop.f32.mrb[0].mxu0
          %834 = vdwg.mxu0
          %v835 = vxor.u32 %v821, 2147483648
          %v836 = vxor.u32 %v824, 2147483648
          %v837 = vxor.u32 %v829, 2147483648
          %v838 = vxor.u32 %v832, 2147483648
          %v839 = vmul.f32 %v835, 1.442695
          %v840 = vpow.pop %v839
          %v841 = vmul.f32 %v836, 1.442695
          %v842 = vpow.pop %v841
          %v843 = vmul.f32 %v837, 1.442695
          %v844 = vpow.pop %v843
          %v845 = vmul.f32 %v838, 1.442695
          %v846 = vpow.pop %v845
          %v847 = vadd.f32 %v840, 1.0
          %v848 = vadd.f32 %v842, 1.0
          %v849 = vadd.f32 %v844, 1.0
          %v850 = vadd.f32 %v846, 1.0
          %v851 = vrcp.pop %v847
          %v852 = vmul.f32 1.0, %v851
          %v853 = vrcp.pop %v848
          %v854 = vmul.f32 1.0, %v853
          %v855 = vrcp.pop %v849
          %v856 = vmul.f32 1.0, %v855
          %v857 = vrcp.pop %v850
          %v858 = vmul.f32 1.0, %v857
          %v859 = vmul.f32 %v821, %v852
          %v860 = vmul.f32 %v824, %v854
          %v861 = vmul.f32 %v829, %v856
          %v862 = vmul.f32 %v832, %v858
          %v863 = vld [vmem:[#allocation8] sm:$0xf]
          %v864 = vld [vmem:[#allocation8 + $0x4] sm:$0xf]
          %v865 = vld [vmem:[#allocation8 + $0x8] sm:$0xf]
          %v866 = vld [vmem:[#allocation8 + $0xc] sm:$0xf]
          %v867 = vld [vmem:[#allocation8 + $0x10] sm:$0xf]
          %v868 = vld [vmem:[#allocation8 + $0x14] sm:$0xf]
          %v869 = vld [vmem:[#allocation8 + $0x18] sm:$0xf]
          %v870 = vld [vmem:[#allocation8 + $0x1c] sm:$0xf]
          %v871 = vld [vmem:[#allocation8 + $0x20] sm:$0xf]
          %v872 = vld [vmem:[#allocation8 + $0x24] sm:$0xf]
          %v873 = vld [vmem:[#allocation8 + $0x28] sm:$0xf]
          %v874 = vld [vmem:[#allocation8 + $0x2c] sm:$0xf]
          %v875 = vld [vmem:[#allocation8 + $0x30] sm:$0xf]
          %v876 = vld [vmem:[#allocation8 + $0x34] sm:$0xf]
          %v877 = vld [vmem:[#allocation8 + $0x38] sm:$0xf]
          %v878 = vld [vmem:[#allocation8 + $0x3c] sm:$0xf]
          %v879 = vld [vmem:[%s7] sm:$0x1]
          %v880 = vpack.c.bf16 %v860, %v859
          %v881 = vpack.c.bf16 %v862, %v861
          %v883 = vlaneseq
          %v884 = vshrl.u32 %v883, 7
          %v885 = vsub.s32 0, %v884
          %v886 = vrot.slane %v879, %v885
          %v904 = vunpack.c.l.b16 %v863
          %v905 = vunpack.c.l.b16 %v864
          %v906 = vunpack.c.l.b16 %v865
          %v907 = vunpack.c.l.b16 %v866
          %v908 = vunpack.c.l.b16 %v867
          %v909 = vunpack.c.l.b16 %v868
          %v910 = vunpack.c.l.b16 %v869
          %v911 = vunpack.c.l.b16 %v870
          %v912 = vunpack.c.l.b16 %v871
          %v913 = vunpack.c.l.b16 %v872
          %v914 = vunpack.c.l.b16 %v873
          %v915 = vunpack.c.l.b16 %v874
          %v916 = vunpack.c.l.b16 %v875
          %v917 = vunpack.c.l.b16 %v876
          %v918 = vunpack.c.l.b16 %v877
          %v919 = vunpack.c.l.b16 %v878
          %v920 = vpack.c.b16 %v905, %v904
          %v921 = vpack.c.b16 %v907, %v906
          %v922 = vpack.c.b16 %v909, %v908
          %v923 = vpack.c.b16 %v911, %v910
          %v924 = vpack.c.b16 %v913, %v912
          %v925 = vpack.c.b16 %v915, %v914
          %v926 = vpack.c.b16 %v917, %v916
          %v927 = vpack.c.b16 %v919, %v918
          %936 = vmatprep.subr.bf16.mxu0 0
          %937 = vmatpush1.bf16.msra.mxu0 %v920
          %938 = vmatprep.subr.bf16.mxu0 0
          %939 = vmatpush1.bf16.msra.mxu0 %v921
          %940 = vmatprep.subr.bf16.mxu0 0
          %941 = vmatpush1.bf16.msra.mxu0 %v922
          %942 = vmatprep.subr.bf16.mxu0 0
          %943 = vmatpush1.bf16.msra.mxu0 %v923
          %944 = vmatprep.subr.bf16.mxu0 0
          %945 = vmatpush1.bf16.msra.mxu0 %v924
          %946 = vmatprep.subr.bf16.mxu0 0
          %947 = vmatpush1.bf16.msra.mxu0 %v925
          %948 = vmatprep.subr.bf16.mxu0 0
          %949 = vmatpush1.bf16.msra.mxu0 %v926
          %950 = vmatprep.subr.bf16.mxu0 0
          %951 = vmatpush1.bf16.msra.mxu0 %v927
          %952 = vmatprep.subr.bf16.mxu0 0
          %953 = vmatpush1.bf16.msra.mxu0 0
          %954 = vmatprep.subr.bf16.mxu0 0
          %955 = vmatpush1.bf16.msra.mxu0 0
          %956 = vmatprep.subr.bf16.mxu0 0
          %957 = vmatpush1.bf16.msra.mxu0 0
          %958 = vmatprep.subr.bf16.mxu0 0
          %959 = vmatpush1.bf16.msra.mxu0 0
          %960 = vmatprep.subr.bf16.mxu0 0
          %961 = vmatpush1.bf16.msra.mxu0 0
          %962 = vmatprep.subr.bf16.mxu0 0
          %963 = vmatpush1.bf16.msra.mxu0 0
          %964 = vmatprep.subr.bf16.mxu0 0
          %965 = vmatpush1.bf16.msra.mxu0 0
          %966 = vmatprep.subr.bf16.mxu0 0
          %967 = vmatpush1.bf16.msra.mxu0 0
          %968 = vmatprep.mubr.bf16.mxu0 0
          %969 = vmatmul.mubr.bf16.gmra.mrb[0].mxu0 %v880
          %v970 = vpop.f32.mrb[0].mxu0
          %v971 = vadd.f32 %v886, %v970
          %v972 = vpop.f32.mrb[0].mxu0
          %v973 = vpop.f32.mrb[0].mxu0
          %v974 = vadd.f32 %v886, %v973
          %v975 = vpop.f32.mrb[0].mxu0
          %976 = vmatprep.mubr.bf16.mxu0 0
          %977 = vmatmul.mubr.bf16.gmra.mrb[0].mxu0 %v881
          %v978 = vpop.f32.mrb[0].mxu0
          %v979 = vadd.f32 %v886, %v978
          %v980 = vpop.f32.mrb[0].mxu0
          %v981 = vpop.f32.mrb[0].mxu0
          %v982 = vadd.f32 %v886, %v981
          %v983 = vpop.f32.mrb[0].mxu0
          %984 = vdwg.mxu0
          %v985 = vxor.u32 %v971, 2147483648
          %v986 = vxor.u32 %v974, 2147483648
          %v987 = vxor.u32 %v979, 2147483648
          %v988 = vxor.u32 %v982, 2147483648
          %v989 = vmul.f32 %v985, 1.442695
          %v990 = vpow.pop %v989
          %v991 = vmul.f32 %v986, 1.442695
          %v992 = vpow.pop %v991
          %v993 = vmul.f32 %v987, 1.442695
          %v994 = vpow.pop %v993
          %v995 = vmul.f32 %v988, 1.442695
          %v996 = vpow.pop %v995
          %v997 = vadd.f32 %v990, 1.0
          %v998 = vadd.f32 %v992, 1.0
          %v999 = vadd.f32 %v994, 1.0
          %v1000 = vadd.f32 %v996, 1.0
          %v1001 = vrcp.pop %v997
          %v1002 = vmul.f32 1.0, %v1001
          %v1003 = vrcp.pop %v998
          %v1004 = vmul.f32 1.0, %v1003
          %v1005 = vrcp.pop %v999
          %v1006 = vmul.f32 1.0, %v1005
          %v1007 = vrcp.pop %v1000
          %v1008 = vmul.f32 1.0, %v1007
          %v1009 = vmul.f32 %v971, %v1002
          %v1010 = vmul.f32 %v974, %v1004
          %v1011 = vmul.f32 %v979, %v1006
          %v1012 = vmul.f32 %v982, %v1008
          %v1013 = vpack.c.bf16 %v1010, %v1009
          %v1014 = vpack.c.bf16 %v1012, %v1011
          %v1015 = vld [vmem:[%s8] sm:$0xf]
          %v1016 = vld [vmem:[%s8 + $0x4] sm:$0xf]
          %v1017 = vld [vmem:[%s8 + $0x8] sm:$0xf]
          %v1018 = vld [vmem:[%s8 + $0xc] sm:$0xf]
          %v1019 = vld [vmem:[%s8 + $0x10] sm:$0xf]
          %v1020 = vld [vmem:[%s8 + $0x14] sm:$0xf]
          %v1021 = vld [vmem:[%s8 + $0x18] sm:$0xf]
          %v1022 = vld [vmem:[%s8 + $0x1c] sm:$0xf]
          %v1023 = vld [vmem:[%s8 + $0x20] sm:$0xf]
          %v1024 = vld [vmem:[%s8 + $0x24] sm:$0xf]
          %v1025 = vld [vmem:[%s8 + $0x28] sm:$0xf]
          %v1026 = vld [vmem:[%s8 + $0x2c] sm:$0xf]
          %v1027 = vld [vmem:[%s8 + $0x30] sm:$0xf]
          %v1028 = vld [vmem:[%s8 + $0x34] sm:$0xf]
          %v1029 = vld [vmem:[%s8 + $0x38] sm:$0xf]
          %v1030 = vld [vmem:[%s8 + $0x3c] sm:$0xf]
          %v1047 = vunpack.c.l.b16 %v1015
          %v1048 = vunpack.c.l.b16 %v1016
          %v1049 = vunpack.c.l.b16 %v1017
          %v1050 = vunpack.c.l.b16 %v1018
          %v1051 = vunpack.c.l.b16 %v1019
          %v1052 = vunpack.c.l.b16 %v1020
          %v1053 = vunpack.c.l.b16 %v1021
          %v1054 = vunpack.c.l.b16 %v1022
          %v1055 = vunpack.c.l.b16 %v1023
          %v1056 = vunpack.c.l.b16 %v1024
          %v1057 = vunpack.c.l.b16 %v1025
          %v1058 = vunpack.c.l.b16 %v1026
          %v1059 = vunpack.c.l.b16 %v1027
          %v1060 = vunpack.c.l.b16 %v1028
          %v1061 = vunpack.c.l.b16 %v1029
          %v1062 = vunpack.c.l.b16 %v1030
          %v1063 = vpack.c.b16 %v1048, %v1047
          %v1064 = vpack.c.b16 %v1050, %v1049
          %v1065 = vpack.c.b16 %v1052, %v1051
          %v1066 = vpack.c.b16 %v1054, %v1053
          %v1067 = vpack.c.b16 %v1056, %v1055
          %v1068 = vpack.c.b16 %v1058, %v1057
          %v1069 = vpack.c.b16 %v1060, %v1059
          %v1070 = vpack.c.b16 %v1062, %v1061
          %1079 = vmatprep.subr.bf16.mxu0 0
          %1080 = vmatpush1.bf16.msra.mxu0 %v1063
          %1081 = vmatprep.subr.bf16.mxu0 0
          %1082 = vmatpush1.bf16.msra.mxu0 %v1064
          %1083 = vmatprep.subr.bf16.mxu0 0
          %1084 = vmatpush1.bf16.msra.mxu0 %v1065
          %1085 = vmatprep.subr.bf16.mxu0 0
          %1086 = vmatpush1.bf16.msra.mxu0 %v1066
          %1087 = vmatprep.subr.bf16.mxu0 0
          %1088 = vmatpush1.bf16.msra.mxu0 %v1067
          %1089 = vmatprep.subr.bf16.mxu0 0
          %1090 = vmatpush1.bf16.msra.mxu0 %v1068
          %1091 = vmatprep.subr.bf16.mxu0 0
          %1092 = vmatpush1.bf16.msra.mxu0 %v1069
          %1093 = vmatprep.subr.bf16.mxu0 0
          %1094 = vmatpush1.bf16.msra.mxu0 %v1070
          %1095 = vmatprep.subr.bf16.mxu0 0
          %1096 = vmatpush1.bf16.msra.mxu0 0
          %1097 = vmatprep.subr.bf16.mxu0 0
          %1098 = vmatpush1.bf16.msra.mxu0 0
          %1099 = vmatprep.subr.bf16.mxu0 0
          %1100 = vmatpush1.bf16.msra.mxu0 0
          %1101 = vmatprep.subr.bf16.mxu0 0
          %1102 = vmatpush1.bf16.msra.mxu0 0
          %1103 = vmatprep.subr.bf16.mxu0 0
          %1104 = vmatpush1.bf16.msra.mxu0 0
          %1105 = vmatprep.subr.bf16.mxu0 0
          %1106 = vmatpush1.bf16.msra.mxu0 0
          %1107 = vmatprep.subr.bf16.mxu0 0
          %1108 = vmatpush1.bf16.msra.mxu0 0
          %1109 = vmatprep.subr.bf16.mxu0 0
          %1110 = vmatpush1.bf16.msra.mxu0 0
          %1111 = vmatprep.mubr.bf16.mxu0 0
          %1112 = vmatmul.mubr.bf16.gmra.mrb[0].mxu0 %v1013
          %v1113 = vpop.f32.mrb[0].mxu0
          %v1114 = vadd.f32 0.0, %v1113
          %v1115 = vpop.f32.mrb[0].mxu0
          %v1116 = vpop.f32.mrb[0].mxu0
          %v1117 = vadd.f32 0.0, %v1116
          %v1118 = vpop.f32.mrb[0].mxu0
          %1119 = vmatprep.mubr.bf16.mxu0 0
          %1120 = vmatmul.mubr.bf16.gmra.mrb[0].mxu0 %v1014
          %v1121 = vpop.f32.mrb[0].mxu0
          %v1122 = vadd.f32 0.0, %v1121
          %v1123 = vpop.f32.mrb[0].mxu0
          %v1124 = vpop.f32.mrb[0].mxu0
          %v1125 = vadd.f32 0.0, %v1124
          %v1126 = vpop.f32.mrb[0].mxu0
          %1127 = vdwg.mxu0
          %vm1128 = vcmask 130048
          %1129 = vst.msk [vmem:[%s456] sm:$0xff] %vm1128, %v1114
          %1130 = vst.msk [vmem:[%s456 + $0x8] sm:$0xff] %vm1128, %v1117
          %1131 = vst.msk [vmem:[%s456 + $0x10] sm:$0xff] %vm1128, %v1122
          %1132 = vst.msk [vmem:[%s456 + $0x18] sm:$0xff] %vm1128, %v1125
        $region68: #{tpu_custom_call.1} parent=47 // pred_fallthru
          _
        %s1133 = smul.u32 4, %s38
        %p1134 = scmp.lt.s32.totalorder %s1133, 7
        %s1135 = scalar_select %p1134, %s1133, 7
        %s1136 = smul.addr %s1135, 8
        %s1137 = scalar_lea.vmem %s9, %s1136
        // Predicated region
        $region69: #{tpu_custom_call.1} parent=47 // pred_check
          %p1138 = pneg %p257
        $region70: #{tpu_custom_call.1} parent=47 // pred_check_branch
          %1140 = sbr.rel (%p1138) target = $region72
        $region71: #{tpu_custom_call.1} parent=47 // pred_region
          %s1141 = smul.u32 4, %s38
        $region72: #{tpu_custom_call.1} parent=47 // pred_fallthru
          _
      $region48: #{tpu_custom_call.1} parent=5 // pred_fallthru
        _
      %p1142 = scmp.le.s32.totalorder 2, %s29
      // Predicated region
      $region73: #{tpu_custom_call.1} parent=5 // pred_check
        %p1143 = pneg %p1142
      $region74: #{tpu_custom_call.1} parent=5 // pred_check_branch
        %1145 = sbr.rel (%p1143) target = $region76
      $region75: #{tpu_custom_call.1} parent=5 // pred_region
        %s1146 = ssub.s32 %s29, 2
        // Predicated region
        $region77: #{tpu_custom_call.1} parent=75 // pred_check
          %p1147 = pneg %p263
        $region78: #{tpu_custom_call.1} parent=75 // pred_check_branch
          %1149 = sbr.rel (%p1147) target = $region80
        $region79: #{tpu_custom_call.1} parent=75 // pred_region
          %s1150 = smul.u32 4, %s40
          %p1151 = scmp.lt.s32.totalorder %s1150, 7
          %s1152 = scalar_select %p1151, %s1150, 7
          %s1153 = smul.addr %s1152, 8
          %s1154 = scalar_lea.vmem %s9, %s1153
        $region80: #{tpu_custom_call.1} parent=75 // pred_fallthru
          _
      $region76: #{tpu_custom_call.1} parent=5 // pred_fallthru
        _
    $region6: #{tpu_custom_call.1} parent=1 // loop_footer
      %s33 = sadd.s32 1, %s29
    $region7: #{tpu_custom_call.1} parent=1 // loop_footer_branch
      %28 = sbr.rel target = $region3
    $region8: #{tpu_custom_call.1} parent=1 // loop_exit
      _
    %1155 = vsyncpa [#allocation7], 1
    %s1156 = scalar_lea.sflag [#allocation7], 1
    %1157 = vsyncpa %s1156, 1
    %1158 = vsyncpa [#allocation9], 1

</llo_original>
